<compile_context>
chip_gen: v6e
topology: v6e:2x2x1
jax: 0.10.0
libtpu: 0.0.40
codegen_flags: <defaults>
</compile_context>

<pallas_src>
import functools

import jax
import jax.numpy as jnp
from jax.experimental import pallas as pl
from jax.experimental.pallas import tpu as pltpu


def _round_up(v, m):
    return -(-v // m) * m


def _pick_tile(dim, unit, cap):
    """Largest multiple of `unit` that divides `dim` and is <= cap.

    `dim` is already padded to a multiple of `unit`, so `unit` always works."""
    best = unit
    t = unit
    cap = min(cap, dim)
    while t <= cap:
        if dim % t == 0:
            best = t
        t += unit
    return best


def _pool_kernel(inv_hw, n_lane_chunks, x_ref, y_ref, acc_ref):
    # x_ref: (rows_t, hw_t); y_ref: (rows_t, 1), resident across the hw axis;
    # acc_ref: (rows_t, 128) f32 scratch, persists across grid steps.
    hw_i = pl.program_id(1)

    @pl.when(hw_i == 0)
    def _():
        acc_ref[...] = jnp.zeros_like(acc_ref)

    # Lane-wide VPU accumulation in 128-lane chunks (hidden under the HBM
    # stream); the XLU cross-lane reduce is deferred to the finalize below so
    # it runs once per row tile instead of once per hw tile.
    for k in range(n_lane_chunks):
        chunk = x_ref[:, pl.ds(k * 128, 128)]
        acc_ref[...] += chunk.astype(jnp.float32)

    @pl.when(hw_i == pl.num_programs(1) - 1)
    def _():
        y_ref[...] = jnp.sum(acc_ref[...], axis=-1, keepdims=True) * inv_hw


def _scale_kernel(x_ref, s_ref, o_ref):
    # x_ref / o_ref: (rows_t, hw_t); s_ref: (rows_t, 1) broadcasts over lanes.
    o_ref[...] = x_ref[...] * s_ref[...]


@jax.jit
def se_layer(x_nchw, w1_t, w2_t):
    """x_nchw: (B, C, H, W); w1_t: (C, C//r); w2_t: (C//r, C)."""
    b, c, h, w = x_nchw.shape
    hw = h * w
    r = b * c
    dtype = x_nchw.dtype
    itemsize = jnp.dtype(dtype).itemsize
    sub = 16 if itemsize == 2 else 8  # sublane tile unit (bf16 packs 2 rows)

    # Flatten (B, C, H, W) -> (B*C, HW) and pad to (sub, 128)-aligned shapes.
    # Padded spatial elements are zero (do not perturb the sum; we divide by
    # the true HW); padded rows are sliced off at the end.
    r_p = _round_up(r, sub)
    hw_p = _round_up(hw, 128)
    x2 = x_nchw.reshape(r, hw)
    if (r_p, hw_p) != (r, hw):
        x2 = jnp.pad(x2, ((0, r_p - r), (0, hw_p - hw)))

    # Tile plan: lane tiles up to 2048, row tiles up to 256, one block <= 2 MiB.
    # Scale-pass live VMEM ~ 4 blocks (~8 MiB) -> fits every generation's
    # scoped-VMEM default (16/32/32 MiB), no vmem_limit_bytes needed.
    blk_bytes = 2 * 1024 * 1024
    hw_t = _pick_tile(hw_p, 128, 2048)
    row_cap = max(sub, (blk_bytes // (hw_t * itemsize)) // sub * sub)
    rows_t = _pick_tile(r_p, sub, min(256, row_cap))
    n_rows = r_p // rows_t
    n_hw = hw_p // hw_t
    grid = (n_rows, n_hw)

    # --- 1) squeeze: global average pool over spatial ------------------------
    pooled = pl.pallas_call(
        functools.partial(_pool_kernel, 1.0 / hw, hw_t // 128),
        out_shape=jax.ShapeDtypeStruct((r_p, 1), jnp.float32),
        grid_spec=pltpu.PrefetchScalarGridSpec(
            num_scalar_prefetch=0,
            grid=grid,
            in_specs=[pl.BlockSpec((rows_t, hw_t), lambda ri, hi: (ri, hi))],
            out_specs=pl.BlockSpec((rows_t, 1), lambda ri, hi: (ri, 0)),
            scratch_shapes=[pltpu.VMEM((rows_t, 128), jnp.float32)],
        ),
        compiler_params=pltpu.CompilerParams(
            dimension_semantics=("parallel", "arbitrary")),
    )(x2)

    # --- 2) excitation: Linear -> ReLU -> Linear -> Sigmoid -------------------
    # Per perf review the standalone gate pallas_call is dropped: its matmul
    # shapes (M=B, N=C//r) pad to a full MXU tile and the extra kernel
    # dispatch / pipeline ramp costs more than the few hundred FLOPs, so this
    # runs as plain (XLA-fused) JAX between the two streaming Pallas passes.
    y = pooled[:r, 0].reshape(b, c).astype(jnp.float32)
    gate = jax.nn.sigmoid(jnp.maximum(y @ w1_t, 0.0) @ w2_t)  # (B, C), f32
    s2 = gate.reshape(r, 1).astype(dtype)
    if r_p != r:
        s2 = jnp.pad(s2, ((0, r_p - r), (0, 0)))

    # --- 3) scale: out = x * s — pure HBM-bandwidth, lane-dense stream --------
    # NOTE: pass input_output_aliases={0: 0} here if the caller donates x to
    # save one full-size HBM allocation (not used: the test keeps x alive).
    out2 = pl.pallas_call(
        _scale_kernel,
        out_shape=jax.ShapeDtypeStruct((r_p, hw_p), dtype),
        grid=grid,
        in_specs=[
            pl.BlockSpec((rows_t, hw_t), lambda ri, hi: (ri, hi)),
            pl.BlockSpec((rows_t, 1), lambda ri, hi: (ri, 0)),
        ],
        out_specs=pl.BlockSpec((rows_t, hw_t), lambda ri, hi: (ri, hi)),
        compiler_params=pltpu.CompilerParams(
            dimension_semantics=("parallel", "parallel")),
    )(x2, s2)

    out = out2[:r, :hw]
    return out.reshape(b, c, h, w)


if __name__ == "__main__":
    B, C, H, W = 2, 32, 16, 16
    reduction = 16
    Cr = C // reduction  # 2

    key = jax.random.PRNGKey(0)
    kx, k1, k2 = jax.random.split(key, 3)

    x = jax.random.normal(kx, (B, C, H, W), dtype=jnp.float32)

    # torch nn.Linear(channel, channel//r, bias=False).weight has shape (Cr, C);
    # deterministic synthetic init, passed pre-transposed for y @ W.T semantics.
    fc1_w = jax.random.normal(k1, (Cr, C), dtype=jnp.float32) * 0.1
    fc2_w = jax.random.normal(k2, (C, Cr), dtype=jnp.float32) * 0.1

    out = se_layer(x, fc1_w.T, fc2_w.T)
    jax.block_until_ready(out)

    # Reference check in plain JAX (same math as the PyTorch module).
    y_ref = jnp.mean(x, axis=(2, 3))                     # (B, C)
    h_ref = jnp.maximum(y_ref @ fc1_w.T, 0.0)            # (B, Cr)
    s_ref = jax.nn.sigmoid(h_ref @ fc2_w.T)              # (B, C)
    ref = x * s_ref[:, :, None, None]
    assert jnp.allclose(out, ref, atol=1e-5, rtol=1e-5), "mismatch vs reference"

    print("KERNEL_OK")
</pallas_src>

<mosaic_0001>
module attributes {stable_mosaic.version = 11 : i64} {
  func.func @_pool_kernel(%arg0: i32, %arg1: i32, %arg2: memref<64x256xf32, #tpu.memory_space<vmem>>, %arg3: memref<64x1xf32, #tpu.memory_space<vmem>>, %arg4: memref<64x128xf32, #tpu.memory_space<vmem>>) attributes {dimension_semantics = [#tpu.dimension_semantics<parallel>, #tpu.dimension_semantics<arbitrary>], iteration_bounds = array<i64: 1, 1>, scalar_prefetch = 0 : i64, scratch_operands = 1 : i64, tpu.core_type = #tpu.core_type<tc>, window_params = [{transform_indices = @transform_0, window_bounds = array<i64: 64, 256>}, {transform_indices = @transform_1, window_bounds = array<i64: 64, 1>}]} {
    %c0_i32 = arith.constant 0 : i32
    %0 = arith.cmpi eq, %arg1, %c0_i32 : i32
    %1 = arith.extui %0 : i1 to i32
    %c0_i32_0 = arith.constant 0 : i32
    %2 = arith.cmpi ne, %1, %c0_i32_0 : i32
    scf.if %2 {
      %cst = arith.constant 0.000000e+00 : f32
      %14 = vector.broadcast %cst : f32 to vector<64x128xf32>
      %c0_13 = arith.constant 0 : index
      %c0_14 = arith.constant 0 : index
      %15 = vector.load %arg4[%c0_13, %c0_14] : memref<64x128xf32, #tpu.memory_space<vmem>>, vector<64x128xf32>
      tpu.vector_store %arg4[%c0_13, %c0_14], %14 {strides = array<i32>} : memref<64x128xf32, #tpu.memory_space<vmem>>, vector<64x128xf32>,
    } else {
    }
    %c0 = arith.constant 0 : index
    %c0_1 = arith.constant 0 : index
    %3 = vector.load %arg2[%c0, %c0_1] : memref<64x256xf32, #tpu.memory_space<vmem>>, vector<64x128xf32>
    %c0_2 = arith.constant 0 : index
    %c0_3 = arith.constant 0 : index
    %4 = vector.load %arg4[%c0_2, %c0_3] : memref<64x128xf32, #tpu.memory_space<vmem>>, vector<64x128xf32>
    %5 = arith.addf %4, %3 : vector<64x128xf32>
    %c0_4 = arith.constant 0 : index
    %c0_5 = arith.constant 0 : index
    %6 = vector.load %arg4[%c0_4, %c0_5] : memref<64x128xf32, #tpu.memory_space<vmem>>, vector<64x128xf32>
    tpu.vector_store %arg4[%c0_4, %c0_5], %5 {strides = array<i32>} : memref<64x128xf32, #tpu.memory_space<vmem>>, vector<64x128xf32>,
    %c0_6 = arith.constant 0 : index
    %c128 = arith.constant 128 : index
    %7 = vector.load %arg2[%c0_6, %c128] : memref<64x256xf32, #tpu.memory_space<vmem>>, vector<64x128xf32>
    %c0_7 = arith.constant 0 : index
    %c0_8 = arith.constant 0 : index
    %8 = vector.load %arg4[%c0_7, %c0_8] : memref<64x128xf32, #tpu.memory_space<vmem>>, vector<64x128xf32>
    %9 = arith.addf %8, %7 : vector<64x128xf32>
    %c0_9 = arith.constant 0 : index
    %c0_10 = arith.constant 0 : index
    %10 = vector.load %arg4[%c0_9, %c0_10] : memref<64x128xf32, #tpu.memory_space<vmem>>, vector<64x128xf32>
    tpu.vector_store %arg4[%c0_9, %c0_10], %9 {strides = array<i32>} : memref<64x128xf32, #tpu.memory_space<vmem>>, vector<64x128xf32>,
    %c0_i32_11 = arith.constant 0 : i32
    %11 = arith.cmpi eq, %arg1, %c0_i32_11 : i32
    %12 = arith.extui %11 : i1 to i32
    %c0_i32_12 = arith.constant 0 : i32
    %13 = arith.cmpi ne, %12, %c0_i32_12 : i32
    scf.if %13 {
      %c0_13 = arith.constant 0 : index
      %c0_14 = arith.constant 0 : index
      %14 = vector.load %arg4[%c0_13, %c0_14] : memref<64x128xf32, #tpu.memory_space<vmem>>, vector<64x128xf32>
      %cst = arith.constant dense<0.000000e+00> : vector<64xf32>
      %15 = vector.multi_reduction <add>, %14, %cst [1] : vector<64x128xf32> to vector<64xf32>
      %16 = vector.shape_cast %15 : vector<64xf32> to vector<64x1xf32>
      %cst_15 = arith.constant 3.906250e-03 : f32
      %17 = vector.broadcast %cst_15 : f32 to vector<64x1xf32>
      %18 = arith.mulf %16, %17 : vector<64x1xf32>
      %c0_16 = arith.constant 0 : index
      %c0_17 = arith.constant 0 : index
      %19 = vector.load %arg3[%c0_16, %c0_17] : memref<64x1xf32, #tpu.memory_space<vmem>>, vector<64x1xf32>
      tpu.vector_store %arg3[%c0_16, %c0_17], %18 {strides = array<i32>} : memref<64x1xf32, #tpu.memory_space<vmem>>, vector<64x1xf32>,
    } else {
    }
    return
  }
  func.func @transform_0(%arg0: i32, %arg1: i32) -> (i32, i32) {
    %c0_i32 = arith.constant 0 : i32
    return %arg0, %arg1 : i32, i32
  }
  func.func @transform_1(%arg0: i32, %arg1: i32) -> (i32, i32) {
    %c0_i32 = arith.constant 0 : i32
    %c0_i32_0 = arith.constant 0 : i32
    return %arg0, %c0_i32 : i32, i32
  }
}

module attributes {stable_mosaic.version = 11 : i64} {
  func.func @_scale_kernel(%arg0: i32, %arg1: i32, %arg2: memref<64x256xf32, #tpu.memory_space<vmem>>, %arg3: memref<64x1xf32, #tpu.memory_space<vmem>>, %arg4: memref<64x256xf32, #tpu.memory_space<vmem>>) attributes {dimension_semantics = [#tpu.dimension_semantics<parallel>, #tpu.dimension_semantics<parallel>], iteration_bounds = array<i64: 1, 1>, scalar_prefetch = 0 : i64, scratch_operands = 0 : i64, tpu.core_type = #tpu.core_type<tc>, window_params = [{transform_indices = @transform_0, window_bounds = array<i64: 64, 256>}, {transform_indices = @transform_1, window_bounds = array<i64: 64, 1>}, {transform_indices = @transform_2, window_bounds = array<i64: 64, 256>}]} {
    %c0 = arith.constant 0 : index
    %c0_0 = arith.constant 0 : index
    %0 = vector.load %arg2[%c0, %c0_0] : memref<64x256xf32, #tpu.memory_space<vmem>>, vector<64x256xf32>
    %c0_1 = arith.constant 0 : index
    %c0_2 = arith.constant 0 : index
    %1 = vector.load %arg3[%c0_1, %c0_2] : memref<64x1xf32, #tpu.memory_space<vmem>>, vector<64x1xf32>
    %2 = vector.broadcast %1 : vector<64x1xf32> to vector<64x256xf32>
    %3 = arith.mulf %0, %2 : vector<64x256xf32>
    %c0_3 = arith.constant 0 : index
    %c0_4 = arith.constant 0 : index
    %4 = vector.load %arg4[%c0_3, %c0_4] : memref<64x256xf32, #tpu.memory_space<vmem>>, vector<64x256xf32>
    tpu.vector_store %arg4[%c0_3, %c0_4], %3 {strides = array<i32>} : memref<64x256xf32, #tpu.memory_space<vmem>>, vector<64x256xf32>,
    return
  }
  func.func @transform_0(%arg0: i32, %arg1: i32) -> (i32, i32) {
    %c0_i32 = arith.constant 0 : i32
    return %arg0, %arg1 : i32, i32
  }
  func.func @transform_1(%arg0: i32, %arg1: i32) -> (i32, i32) {
    %c0_i32 = arith.constant 0 : i32
    %c0_i32_0 = arith.constant 0 : i32
    return %arg0, %c0_i32 : i32, i32
  }
  func.func @transform_2(%arg0: i32, %arg1: i32) -> (i32, i32) {
    %c0_i32 = arith.constant 0 : i32
    return %arg0, %arg1 : i32, i32
  }
}

</mosaic_0001>

<llo_original>
// kernel: squeeze.1
$region0: #{squeeze.1}
  %s0 = inlined_call_operand.vmem [shape: bf16[64], index: 0, kind: input, shape index: {}]
  %s1 = inlined_call_operand.vmem [shape: bf16[2,32], index: 1, kind: output, shape index: {}]
  $region1: #{squeeze.1} parent=0
    #allocation0 [shape = 'u8[4096]{0}', space=vmem, size = 0x1000, scoped, tag = 'scoped mem for output reshape']
    #allocation1 [shape = 'u8[4096]{0}', space=vmem, size = 0x1000, scoped, tag = 'scoped mem for input reshape']
    %s3 = smul.u32 1, 2
    %s4 = sshll.u32 1, %s3
    %s5 = ssub.s32 %s4, 1
    %s6 = sshrl.u32 %s5, 1
    %s7 = sor.u32 %s5, %s6
    %s8 = sand.u32 %s7, 85
    %s9 = sshrl.u32 %s8, 1
    %s10 = sor.u32 %s8, %s9
    %s11 = sand.u32 51, %s10
    %s12 = sshrl.u32 %s11, 2
    %s13 = sor.u32 %s11, %s12
    %s14 = sand.u32 15, %s13
    %v15 = vld [vmem:[%s0] sm:%s14]
    %v16 = vunpack.c.l.bf16 %v15
    %v17 = vunpack.c.h.bf16 %v15
    %18 = vst [vmem:[#allocation1] sm:%s5] %v16
    %v19 = vld [vmem:[#allocation1] sm:$0x1]
    %vm20 = vcmask 261120
    %21 = vst.msk [vmem:[#allocation0] sm:$0x1] %vm20, %v19
    %v22 = vld [vmem:[#allocation1] sm:$0x1]
    %23 = vrot.lane.b32.xlu0 %v22, 96
    %v24 = vpop.permute.xlu0 %23
    %vm25 = vcmask 261120
    %s26 = scalar_lea.vmem [#allocation0], 1
    %27 = vst.msk [vmem:[%s26] sm:$0x1] %vm25, %v24
    %s29 = smul.u32 1, 2
    %s30 = sshll.u32 1, %s29
    %s31 = ssub.s32 %s30, 1
    %s32 = sshrl.u32 %s29, 1
    %v33 = vld [vmem:[#allocation0] sm:%s31]
    %v34 = vpack.c.bf16 0.0, %v33
    %s35 = sshll.u32 1, %s32
    %s36 = ssub.s32 %s35, 1
    %37 = vst [vmem:[%s1] sm:%s36] %v34

// kernel: se_layer.2
$region0: #{se_layer.2}
  #allocation0 [shape = 'u32[]', space=smem, size = 0x4, offset = 0x4, fixed_abs, tag = 'smem constant byte address 0x4 - core index']
  #allocation1 [shape = 'u32[144,128]{1,0:T(1,128)}', space=vmem, size = 0x12000, scoped, tag = 'internal scratch']
  #allocation2 [shape = 'f32[64,128]{1,0:T(8,128)}', space=vmem, size = 0x8000, scoped, tag = 'scratch operand']
  %s0 = inlined_call_operand.vmem [shape: f32[64,256], index: 0, kind: input, shape index: {}]
  %s1 = inlined_call_operand.vmem [shape: f32[64,1], index: 1, kind: output, shape index: {}]
  %s2 = sld [smem:[#allocation0]]
  $region22: #{se_layer.2} parent=0
    _
  %s4 = ssub.s32 1, %s2
  %s5 = scalar_select 0, %s4, %s2
  // Predicated region
  $region2: #{se_layer.2} parent=0 // pred_check
    _
  $region3: #{se_layer.2} parent=0 // pred_check_branch
    %7 = sbr.rel (0) target = $region5
  $region4: #{se_layer.2} parent=0 // pred_region
    _
  $region5: #{se_layer.2} parent=0 // pred_fallthru
    _
  %p8 = scmp.eq.s32.totalorder 0, 0
  // Predicated region
  $region6: #{se_layer.2} parent=0 // pred_check
    %p9 = pneg %p8
  $region7: #{se_layer.2} parent=0 // pred_check_branch
    %11 = sbr.rel (%p9) target = $region9
  $region8: #{se_layer.2} parent=0 // pred_region
    %12 = vst [vmem:[#allocation2] sm:$0xff] 0.0
    %13 = vst [vmem:[#allocation2 + $0x8] sm:$0xff] 0.0
    %14 = vst [vmem:[#allocation2 + $0x10] sm:$0xff] 0.0
    %15 = vst [vmem:[#allocation2 + $0x18] sm:$0xff] 0.0
    %16 = vst [vmem:[#allocation2 + $0x20] sm:$0xff] 0.0
    %17 = vst [vmem:[#allocation2 + $0x28] sm:$0xff] 0.0
    %18 = vst [vmem:[#allocation2 + $0x30] sm:$0xff] 0.0
    %19 = vst [vmem:[#allocation2 + $0x38] sm:$0xff] 0.0
  $region9: #{se_layer.2} parent=0 // pred_fallthru
    _
  %v20 = vld [vmem:[%s0] sm:$0xff]
  %v21 = vld [vmem:[%s0 + $0x10] sm:$0xff]
  %v22 = vld [vmem:[%s0 + $0x20] sm:$0xff]
  %v23 = vld [vmem:[%s0 + $0x30] sm:$0xff]
  %v24 = vld [vmem:[%s0 + $0x40] sm:$0xff]
  %v25 = vld [vmem:[%s0 + $0x50] sm:$0xff]
  %v26 = vld [vmem:[%s0 + $0x60] sm:$0xff]
  %v27 = vld [vmem:[%s0 + $0x70] sm:$0xff]
  %v28 = vld [vmem:[#allocation2] sm:$0xff]
  %v29 = vld [vmem:[#allocation2 + $0x8] sm:$0xff]
  %v30 = vld [vmem:[#allocation2 + $0x10] sm:$0xff]
  %v31 = vld [vmem:[#allocation2 + $0x18] sm:$0xff]
  %v32 = vld [vmem:[#allocation2 + $0x20] sm:$0xff]
  %v33 = vld [vmem:[#allocation2 + $0x28] sm:$0xff]
  %v34 = vld [vmem:[#allocation2 + $0x30] sm:$0xff]
  %v35 = vld [vmem:[#allocation2 + $0x38] sm:$0xff]
  %v36 = vadd.f32 %v28, %v20
  %v37 = vadd.f32 %v29, %v21
  %v38 = vadd.f32 %v30, %v22
  %v39 = vadd.f32 %v31, %v23
  %v40 = vadd.f32 %v32, %v24
  %v41 = vadd.f32 %v33, %v25
  %v42 = vadd.f32 %v34, %v26
  %v43 = vadd.f32 %v35, %v27
  %44 = vst [vmem:[#allocation2] sm:$0xff] %v36
  %45 = vst [vmem:[#allocation2 + $0x8] sm:$0xff] %v37
  %46 = vst [vmem:[#allocation2 + $0x10] sm:$0xff] %v38
  %47 = vst [vmem:[#allocation2 + $0x18] sm:$0xff] %v39
  %48 = vst [vmem:[#allocation2 + $0x20] sm:$0xff] %v40
  %49 = vst [vmem:[#allocation2 + $0x28] sm:$0xff] %v41
  %50 = vst [vmem:[#allocation2 + $0x30] sm:$0xff] %v42
  %51 = vst [vmem:[#allocation2 + $0x38] sm:$0xff] %v43
  %v52 = vld [vmem:[%s0 + $0x8] sm:$0xff]
  %v53 = vld [vmem:[%s0 + $0x18] sm:$0xff]
  %v54 = vld [vmem:[%s0 + $0x28] sm:$0xff]
  %v55 = vld [vmem:[%s0 + $0x38] sm:$0xff]
  %v56 = vld [vmem:[%s0 + $0x48] sm:$0xff]
  %v57 = vld [vmem:[%s0 + $0x58] sm:$0xff]
  %v58 = vld [vmem:[%s0 + $0x68] sm:$0xff]
  %v59 = vld [vmem:[%s0 + $0x78] sm:$0xff]
  %v60 = vld [vmem:[#allocation2] sm:$0xff]
  %v61 = vld [vmem:[#allocation2 + $0x8] sm:$0xff]
  %v62 = vld [vmem:[#allocation2 + $0x10] sm:$0xff]
  %v63 = vld [vmem:[#allocation2 + $0x18] sm:$0xff]
  %v64 = vld [vmem:[#allocation2 + $0x20] sm:$0xff]
  %v65 = vld [vmem:[#allocation2 + $0x28] sm:$0xff]
  %v66 = vld [vmem:[#allocation2 + $0x30] sm:$0xff]
  %v67 = vld [vmem:[#allocation2 + $0x38] sm:$0xff]
  %v68 = vadd.f32 %v60, %v52
  %v69 = vadd.f32 %v61, %v53
  %v70 = vadd.f32 %v62, %v54
  %v71 = vadd.f32 %v63, %v55
  %v72 = vadd.f32 %v64, %v56
  %v73 = vadd.f32 %v65, %v57
  %v74 = vadd.f32 %v66, %v58
  %v75 = vadd.f32 %v67, %v59
  %76 = vst [vmem:[#allocation2] sm:$0xff] %v68
  %77 = vst [vmem:[#allocation2 + $0x8] sm:$0xff] %v69
  %78 = vst [vmem:[#allocation2 + $0x10] sm:$0xff] %v70
  %79 = vst [vmem:[#allocation2 + $0x18] sm:$0xff] %v71
  %80 = vst [vmem:[#allocation2 + $0x20] sm:$0xff] %v72
  %81 = vst [vmem:[#allocation2 + $0x28] sm:$0xff] %v73
  %82 = vst [vmem:[#allocation2 + $0x30] sm:$0xff] %v74
  %83 = vst [vmem:[#allocation2 + $0x38] sm:$0xff] %v75
  // Predicated region
  $region10: #{se_layer.2} parent=0 // pred_check
    %p84 = pneg %p8
  $region11: #{se_layer.2} parent=0 // pred_check_branch
    %86 = sbr.rel (%p84) target = $region13
  $region12: #{se_layer.2} parent=0 // pred_region
    %v87 = vld [vmem:[#allocation2] sm:$0xff]
    %v88 = vld [vmem:[#allocation2 + $0x8] sm:$0xff]
    %v89 = vld [vmem:[#allocation2 + $0x10] sm:$0xff]
    %v90 = vld [vmem:[#allocation2 + $0x18] sm:$0xff]
    %v91 = vld [vmem:[#allocation2 + $0x20] sm:$0xff]
    %v92 = vld [vmem:[#allocation2 + $0x28] sm:$0xff]
    %v93 = vld [vmem:[#allocation2 + $0x30] sm:$0xff]
    %v94 = vld [vmem:[#allocation2 + $0x38] sm:$0xff]
    %95 = vadd.xlane.f32.xlu0 %v87
    %v96 = vpop.xlane.xlu0 %95
    %97 = vadd.xlane.f32.xlu0 %v88
    %v98 = vpop.xlane.xlu0 %97
    %99 = vadd.xlane.f32.xlu0 %v89
    %v100 = vpop.xlane.xlu0 %99
    %101 = vadd.xlane.f32.xlu0 %v90
    %v102 = vpop.xlane.xlu0 %101
    %103 = vadd.xlane.f32.xlu0 %v91
    %v104 = vpop.xlane.xlu0 %103
    %105 = vadd.xlane.f32.xlu0 %v92
    %v106 = vpop.xlane.xlu0 %105
    %107 = vadd.xlane.f32.xlu0 %v93
    %v108 = vpop.xlane.xlu0 %107
    %109 = vadd.xlane.f32.xlu0 %v94
    %v110 = vpop.xlane.xlu0 %109
    %v111 = vmul.f32 %v96, 0.00390625
    %v112 = vmul.f32 %v98, 0.00390625
    %v113 = vmul.f32 %v100, 0.00390625
    %v114 = vmul.f32 %v102, 0.00390625
    %v115 = vmul.f32 %v104, 0.00390625
    %v116 = vmul.f32 %v106, 0.00390625
    %v117 = vmul.f32 %v108, 0.00390625
    %v118 = vmul.f32 %v110, 0.00390625
    %vm119 = vcmask 7168
    %120 = vst.msk [vmem:[%s1] sm:$0xff] %vm119, %v111
    %121 = vst.msk [vmem:[%s1 + $0x8] sm:$0xff] %vm119, %v112
    %122 = vst.msk [vmem:[%s1 + $0x10] sm:$0xff] %vm119, %v113
    %123 = vst.msk [vmem:[%s1 + $0x18] sm:$0xff] %vm119, %v114
    %124 = vst.msk [vmem:[%s1 + $0x20] sm:$0xff] %vm119, %v115
    %125 = vst.msk [vmem:[%s1 + $0x28] sm:$0xff] %vm119, %v116
    %126 = vst.msk [vmem:[%s1 + $0x30] sm:$0xff] %vm119, %v117
    %127 = vst.msk [vmem:[%s1 + $0x38] sm:$0xff] %vm119, %v118
  $region13: #{se_layer.2} parent=0 // pred_fallthru
    _
  // Predicated region
  $region14: #{se_layer.2} parent=0 // pred_check
    _
  $region15: #{se_layer.2} parent=0 // pred_check_branch
    %129 = sbr.rel (0) target = $region17
  $region16: #{se_layer.2} parent=0 // pred_region
    _
  $region17: #{se_layer.2} parent=0 // pred_fallthru
    _
  // Predicated region
  $region18: #{se_layer.2} parent=0 // pred_check
    _
  $region19: #{se_layer.2} parent=0 // pred_check_branch
    %131 = sbr.rel (0) target = $region21
  $region20: #{se_layer.2} parent=0 // pred_region
    _
  $region21: #{se_layer.2} parent=0 // pred_fallthru
    _

// kernel: se_layer.3
$region0: #{se_layer.3}
  #allocation0 [shape = 'u32[]', space=smem, size = 0x4, offset = 0x4, fixed_abs, tag = 'smem constant byte address 0x4 - core index']
  #allocation1 [shape = 'u32[144,128]{1,0:T(1,128)}', space=vmem, size = 0x12000, scoped, tag = 'internal scratch']
  %s0 = inlined_call_operand.vmem [shape: f32[64,256], index: 0, kind: input, shape index: {}]
  %s1 = inlined_call_operand.vmem [shape: f32[64,1], index: 1, kind: input, shape index: {}]
  %s2 = inlined_call_operand.vmem [shape: f32[64,256], index: 2, kind: output, shape index: {}]
  %s3 = sld [smem:[#allocation0]]
  $region18: #{se_layer.3} parent=0
    _
  %s5 = ssub.s32 1, %s3
  %s6 = scalar_select 0, %s5, %s3
  // Predicated region
  $region2: #{se_layer.3} parent=0 // pred_check
    _
  $region3: #{se_layer.3} parent=0 // pred_check_branch
    %8 = sbr.rel (0) target = $region5
  $region4: #{se_layer.3} parent=0 // pred_region
    _
  $region5: #{se_layer.3} parent=0 // pred_fallthru
    _
  // Predicated region
  $region6: #{se_layer.3} parent=0 // pred_check
    _
  $region7: #{se_layer.3} parent=0 // pred_check_branch
    %10 = sbr.rel (0) target = $region9
  $region8: #{se_layer.3} parent=0 // pred_region
    _
  $region9: #{se_layer.3} parent=0 // pred_fallthru
    _
  %v11 = vld [vmem:[%s0] sm:$0xff]
  %v12 = vld [vmem:[%s0 + $0x8] sm:$0xff]
  %v13 = vld [vmem:[%s0 + $0x10] sm:$0xff]
  %v14 = vld [vmem:[%s0 + $0x18] sm:$0xff]
  %v15 = vld [vmem:[%s0 + $0x20] sm:$0xff]
  %v16 = vld [vmem:[%s0 + $0x28] sm:$0xff]
  %v17 = vld [vmem:[%s0 + $0x30] sm:$0xff]
  %v18 = vld [vmem:[%s0 + $0x38] sm:$0xff]
  %v19 = vld [vmem:[%s0 + $0x40] sm:$0xff]
  %v20 = vld [vmem:[%s0 + $0x48] sm:$0xff]
  %v21 = vld [vmem:[%s0 + $0x50] sm:$0xff]
  %v22 = vld [vmem:[%s0 + $0x58] sm:$0xff]
  %v23 = vld [vmem:[%s0 + $0x60] sm:$0xff]
  %v24 = vld [vmem:[%s0 + $0x68] sm:$0xff]
  %v25 = vld [vmem:[%s0 + $0x70] sm:$0xff]
  %v26 = vld [vmem:[%s0 + $0x78] sm:$0xff]
  %v27 = vld [vmem:[%s1] sm:$0xff]
  %v28 = vld [vmem:[%s1 + $0x8] sm:$0xff]
  %v29 = vld [vmem:[%s1 + $0x10] sm:$0xff]
  %v30 = vld [vmem:[%s1 + $0x18] sm:$0xff]
  %v31 = vld [vmem:[%s1 + $0x20] sm:$0xff]
  %v32 = vld [vmem:[%s1 + $0x28] sm:$0xff]
  %v33 = vld [vmem:[%s1 + $0x30] sm:$0xff]
  %v34 = vld [vmem:[%s1 + $0x38] sm:$0xff]
  %36 = vset.pattern.permute.xlu0 0
  %37 = vperm.xlu0 %36, %v27
  %v38 = vpop.permute.xlu0 %37
  %41 = vset.pattern.permute.xlu0 0
  %42 = vperm.xlu0 %41, %v28
  %v43 = vpop.permute.xlu0 %42
  %46 = vset.pattern.permute.xlu0 0
  %47 = vperm.xlu0 %46, %v29
  %v48 = vpop.permute.xlu0 %47
  %51 = vset.pattern.permute.xlu0 0
  %52 = vperm.xlu0 %51, %v30
  %v53 = vpop.permute.xlu0 %52
  %56 = vset.pattern.permute.xlu0 0
  %57 = vperm.xlu0 %56, %v31
  %v58 = vpop.permute.xlu0 %57
  %61 = vset.pattern.permute.xlu0 0
  %62 = vperm.xlu0 %61, %v32
  %v63 = vpop.permute.xlu0 %62
  %66 = vset.pattern.permute.xlu0 0
  %67 = vperm.xlu0 %66, %v33
  %v68 = vpop.permute.xlu0 %67
  %71 = vset.pattern.permute.xlu0 0
  %72 = vperm.xlu0 %71, %v34
  %v73 = vpop.permute.xlu0 %72
  %v75 = vmul.f32 %v11, %v38
  %v76 = vmul.f32 %v12, %v38
  %v77 = vmul.f32 %v13, %v43
  %v78 = vmul.f32 %v14, %v43
  %v79 = vmul.f32 %v15, %v48
  %v80 = vmul.f32 %v16, %v48
  %v81 = vmul.f32 %v17, %v53
  %v82 = vmul.f32 %v18, %v53
  %v83 = vmul.f32 %v19, %v58
  %v84 = vmul.f32 %v20, %v58
  %v85 = vmul.f32 %v21, %v63
  %v86 = vmul.f32 %v22, %v63
  %v87 = vmul.f32 %v23, %v68
  %v88 = vmul.f32 %v24, %v68
  %v89 = vmul.f32 %v25, %v73
  %v90 = vmul.f32 %v26, %v73
  %91 = vst [vmem:[%s2] sm:$0xff] %v75
  %92 = vst [vmem:[%s2 + $0x8] sm:$0xff] %v76
  %93 = vst [vmem:[%s2 + $0x10] sm:$0xff] %v77
  %94 = vst [vmem:[%s2 + $0x18] sm:$0xff] %v78
  %95 = vst [vmem:[%s2 + $0x20] sm:$0xff] %v79
  %96 = vst [vmem:[%s2 + $0x28] sm:$0xff] %v80
  %97 = vst [vmem:[%s2 + $0x30] sm:$0xff] %v81
  %98 = vst [vmem:[%s2 + $0x38] sm:$0xff] %v82
  %99 = vst [vmem:[%s2 + $0x40] sm:$0xff] %v83
  %100 = vst [vmem:[%s2 + $0x48] sm:$0xff] %v84
  %101 = vst [vmem:[%s2 + $0x50] sm:$0xff] %v85
  %102 = vst [vmem:[%s2 + $0x58] sm:$0xff] %v86
  %103 = vst [vmem:[%s2 + $0x60] sm:$0xff] %v87
  %104 = vst [vmem:[%s2 + $0x68] sm:$0xff] %v88
  %105 = vst [vmem:[%s2 + $0x70] sm:$0xff] %v89
  %106 = vst [vmem:[%s2 + $0x78] sm:$0xff] %v90
  // Predicated region
  $region10: #{se_layer.3} parent=0 // pred_check
    _
  $region11: #{se_layer.3} parent=0 // pred_check_branch
    %108 = sbr.rel (0) target = $region13
  $region12: #{se_layer.3} parent=0 // pred_region
    _
  $region13: #{se_layer.3} parent=0 // pred_fallthru
    _
  // Predicated region
  $region14: #{se_layer.3} parent=0 // pred_check
    _
  $region15: #{se_layer.3} parent=0 // pred_check_branch
    %110 = sbr.rel (0) target = $region17
  $region16: #{se_layer.3} parent=0 // pred_region
    _
  $region17: #{se_layer.3} parent=0 // pred_fallthru
    _

</llo_original>
